<compile_context>
chip_gen: v7x
topology: tpu7x:2x2x1
jax: 0.10.0
libtpu: 0.0.40
codegen_flags: <defaults>
</compile_context>

<pallas_src>
import jax
import jax.numpy as jnp
from jax.experimental import pallas as pl
from jax.experimental.pallas import tpu as pltpu


def _vmem_capacity_bytes():
    try:
        return int(pltpu.get_tpu_info().vmem_capacity_bytes)
    except Exception:
        return 64 * 1024 * 1024          # conservative (v7x) fallback


def _choose_tile_lanes(FK, Bc, N):
    """Number of output time samples (lanes) per grid step; multiple of 128 or == FK."""
    if FK <= 128:
        return FK
    cap = _vmem_capacity_bytes()
    budget = min(int(cap * 0.30), 36 * 1024 * 1024)   # pipelined blocks + temporaries
    per_lane = 4 * (7 * Bc + 4 * N)                   # dbl-buffered in/out + f32 temps
    tl = budget // per_lane
    if tl >= FK:
        return FK
    tl = max(128, (tl // 128) * 128)
    return int(min(tl, FK))


def _vmem_limit_bytes():
    cap = _vmem_capacity_bytes()
    return int(max(32 * 1024 * 1024, min(int(cap * 0.6), 100 * 1024 * 1024)))


def _make_kernel(P):
    def kernel(alpha_ref, w_ref, xs_ref, head_ref, o_ref):
        # alpha_ref: SMEM (1,)              PReLU slope
        # w_ref:     VMEM (N, Bc)           1x1-conv weight, resident across grid
        # xs_ref:    VMEM (1, 2, Bc, tL)    stream 0 = first halves, stream 1 = second halves
        # head_ref:  VMEM (1, 1, Bc, P)     first P stream-0 samples of the NEXT tile
        # o_ref:     VMEM (1, N, tL)        lane-dense output tile
        a = xs_ref[0, 0]                   # (Bc, tL)
        b = xs_ref[0, 1]                   # (Bc, tL)
        head = head_ref[0, 0]              # (Bc, P)

        # Overlap-add: z[:, t] = a_flat[t0 + t + P] + b_flat[t0 + t]
        # Single lane shift + tail merge (replaces the old per-frame double concat).
        sa = jnp.concatenate([a[:, P:], head], axis=1)         # (Bc, tL)
        z = sa + b

        alpha = alpha_ref[0]
        h = jnp.where(z >= 0, z, alpha * z)                     # PReLU (single slope)

        # ONE (N,Bc) x (Bc,tL) MXU contraction for the whole tile, f32 accumulation.
        y = jnp.dot(w_ref[...], h, preferred_element_type=jnp.float32)   # (N, tL)
        o_ref[0] = jnp.maximum(y, 0.0).astype(o_ref.dtype)               # ReLU, full-tile store

    return kernel


def adder_forward(x, gap, M, P_out, w, alpha, tile_lanes=None):
    """x: (Mb, Bc, K, S) f32, w: (N, Bc) f32 (conv kernel dim squeezed), alpha: (1,) f32.
    Returns (M, N, P_out) — ReLU(Conv1x1(PReLU(_over_add(x, gap))))."""
    Mb, Bc, K, S = x.shape
    N = w.shape[0]
    assert w.shape == (N, Bc)
    assert K >= 2 and S % 2 == 0
    P = K // 2
    F = S // 2
    FK = F * K
    Ltot = FK - P - gap                       # valid overlap-added length per batch element
    assert 0 < Ltot <= FK - P

    # Single layout-glue copy (the torch .transpose().contiguous()); time is lane-dense.
    xt5 = jnp.swapaxes(x, 2, 3).reshape(Mb, Bc, F, 2, K)          # [m,c,f,p,k] = x[m,c,k,2f+p]
    xs = jnp.moveaxis(xt5, 3, 1).reshape(Mb, 2, Bc, FK)           # stream 0 = a, stream 1 = b

    tL = tile_lanes if tile_lanes is not None else _choose_tile_lanes(FK, Bc, N)
    assert tL == FK or (tL % 128 == 0 and 0 < tL < FK), "tile_lanes must be a multiple of 128 or == F*K"
    nT = -(-FK // tL)

    # Tiny cross-tile "heads": first P stream-0 samples of the NEXT tile (zeros past the end —
    # those positions only feed the trimmed half-frame/gap tail).  Removes the carry scratch
    # and lets both grid axes run "parallel".
    a_pad = jnp.pad(xs[:, 0], ((0, 0), (0, 0), (0, (nT + 1) * tL - FK)))
    heads = a_pad.reshape(Mb, Bc, nT + 1, tL)[:, :, 1:, :P].transpose(0, 2, 1, 3)   # (Mb, nT, Bc, P)

    kernel = _make_kernel(P)

    flops = 2 * Mb * N * Bc * FK + 5 * Mb * Bc * FK
    bytes_accessed = 4 * (int(xs.size) + int(heads.size) + int(w.size) + Mb * N * FK + int(alpha.size))

    out3 = pl.pallas_call(
        kernel,
        out_shape=jax.ShapeDtypeStruct((Mb, N, FK), x.dtype),
        grid=(Mb, nT),
        in_specs=[
            pl.BlockSpec(memory_space=pltpu.MemorySpace.SMEM),              # alpha (scalar)
            pl.BlockSpec((N, Bc), lambda m, j: (0, 0)),                     # weight, resident
            pl.BlockSpec((1, 2, Bc, tL), lambda m, j: (m, 0, 0, j)),        # xs tile (lane-dense)
            pl.BlockSpec((1, 1, Bc, P), lambda m, j: (m, j, 0, 0)),         # next-tile head
        ],
        out_specs=pl.BlockSpec((1, N, tL), lambda m, j: (m, 0, j)),         # lane-dense output slab
        compiler_params=pltpu.CompilerParams(
            dimension_semantics=("parallel", "parallel"),
            vmem_limit_bytes=_vmem_limit_bytes(),
        ),
        cost_estimate=pl.CostEstimate(flops=flops, transcendentals=0,
                                      bytes_accessed=bytes_accessed),
    )(alpha, w, xs, heads)

    # Drop the half-frame/gap tail (free slice), then the torch view(M, N, P).
    out = out3[:, :, :Ltot]
    return out.reshape(M, N, P_out)


def _reference_forward(x, gap, M, P_out, w, alpha):
    Mb, Bc, K, S = x.shape
    half = K // 2
    xt = jnp.swapaxes(x, 2, 3).reshape(Mb, Bc, -1, K * 2)
    x1 = xt[..., :K].reshape(Mb, Bc, -1)[:, :, half:]
    x2 = xt[..., K:].reshape(Mb, Bc, -1)[:, :, :-half]
    z = x1 + x2
    if gap > 0:
        z = z[:, :, :-gap]
    h = jnp.where(z >= 0, z, alpha[0] * z)
    y = jnp.einsum("nb,mbl->mnl", w, h)
    return jnp.maximum(y, 0.0).reshape(M, w.shape[0], P_out)


if __name__ == "__main__":
    key = jax.random.PRNGKey(0)
    k1, k2, k3, k4, k5, k6 = jax.random.split(key, 6)
    alpha = jnp.array([0.25], dtype=jnp.float32)

    # --- Test A: tiny shapes, single time-tile path (tL == F*K) ---
    Mb, Bc, K, S, N, gap = 2, 4, 8, 6, 6, 2
    F = S // 2
    L = F * K - K // 2 - gap                    # 18
    x = jax.random.normal(k1, (Mb, Bc, K, S), dtype=jnp.float32)
    w = jax.random.normal(k2, (N, Bc), dtype=jnp.float32) * 0.1
    out = jax.block_until_ready(adder_forward(x, gap, Mb, L, w, alpha))
    ref = _reference_forward(x, gap, Mb, L, w, alpha)
    assert out.shape == (Mb, N, L), out.shape
    assert jnp.allclose(out, ref, atol=1e-5, rtol=1e-5), "test A mismatch vs reference"

    # --- Test B: multi-tile path, exact 128-lane tiles (exercises the heads handoff) ---
    Mb, Bc, K, S, N, gap = 2, 8, 16, 48, 8, 3
    F = S // 2                                  # 24 frames -> F*K = 384 -> 3 exact 128-lane tiles
    L = F * K - K // 2 - gap                    # 373
    x = jax.random.normal(k3, (Mb, Bc, K, S), dtype=jnp.float32)
    w = jax.random.normal(k4, (N, Bc), dtype=jnp.float32) * 0.1
    out = jax.block_until_ready(adder_forward(x, gap, Mb, L, w, alpha, tile_lanes=128))
    ref = _reference_forward(x, gap, Mb, L, w, alpha)
    assert out.shape == (Mb, N, L), out.shape
    assert jnp.allclose(out, ref, atol=1e-5, rtol=1e-5), "test B mismatch vs reference"

    # --- Test C: ragged last tile + odd channel counts + Mb == 1 ---
    Mb, Bc, K, S, N, gap = 1, 5, 16, 42, 7, 5
    F = S // 2                                  # 21 frames -> F*K = 336 -> tiles 128/128/80 (ragged)
    L = F * K - K // 2 - gap                    # 323
    x = jax.random.normal(k5, (Mb, Bc, K, S), dtype=jnp.float32)
    w = jax.random.normal(k6, (N, Bc), dtype=jnp.float32) * 0.1
    out = jax.block_until_ready(adder_forward(x, gap, Mb, L, w, alpha, tile_lanes=128))
    ref = _reference_forward(x, gap, Mb, L, w, alpha)
    assert out.shape == (Mb, N, L), out.shape
    assert jnp.allclose(out, ref, atol=1e-5, rtol=1e-5), "test C mismatch vs reference"

    print("KERNEL_OK")
</pallas_src>

<mosaic_0001>
module attributes {stable_mosaic.version = 11 : i64} {
  func.func @kernel(%arg0: i32, %arg1: i32, %arg2: memref<1xf32, #tpu.memory_space<smem>>, %arg3: memref<6x4xf32, #tpu.memory_space<vmem>>, %arg4: memref<1x2x4x24xf32, #tpu.memory_space<vmem>>, %arg5: memref<1x1x4x4xf32, #tpu.memory_space<vmem>>, %arg6: memref<1x6x24xf32, #tpu.memory_space<vmem>>) attributes {dimension_semantics = [#tpu.dimension_semantics<parallel>, #tpu.dimension_semantics<parallel>], iteration_bounds = array<i64: 2, 1>, scalar_prefetch = 0 : i64, scratch_operands = 0 : i64, tpu.core_type = #tpu.core_type<tc>, window_params = [{transform_indices = @transform_0, window_bounds = array<i64: 1>}, {pipeline_mode = #tpu.pipeline_mode<synchronous>, transform_indices = @transform_1, window_bounds = array<i64: 6, 4>}, {transform_indices = @transform_2, window_bounds = array<i64: 1, 2, 4, 24>}, {transform_indices = @transform_3, window_bounds = array<i64: 1, 1, 4, 4>}, {transform_indices = @transform_4, window_bounds = array<i64: 1, 6, 24>}]} {
    %c0 = arith.constant 0 : index
    %c0_0 = arith.constant 0 : index
    %c0_1 = arith.constant 0 : index
    %c0_2 = arith.constant 0 : index
    %0 = vector.load %arg4[%c0, %c0_0, %c0_1, %c0_2] : memref<1x2x4x24xf32, #tpu.memory_space<vmem>>, vector<1x1x4x24xf32>
    %1 = vector.shape_cast %0 : vector<1x1x4x24xf32> to vector<4x24xf32>
    %c0_3 = arith.constant 0 : index
    %c1 = arith.constant 1 : index
    %c0_4 = arith.constant 0 : index
    %c0_5 = arith.constant 0 : index
    %2 = vector.load %arg4[%c0_3, %c1, %c0_4, %c0_5] : memref<1x2x4x24xf32, #tpu.memory_space<vmem>>, vector<1x1x4x24xf32>
    %3 = vector.shape_cast %2 : vector<1x1x4x24xf32> to vector<4x24xf32>
    %c0_6 = arith.constant 0 : index
    %c0_7 = arith.constant 0 : index
    %c0_8 = arith.constant 0 : index
    %c0_9 = arith.constant 0 : index
    %4 = vector.load %arg5[%c0_6, %c0_7, %c0_8, %c0_9] : memref<1x1x4x4xf32, #tpu.memory_space<vmem>>, vector<1x1x4x4xf32>
    %5 = vector.shape_cast %4 : vector<1x1x4x4xf32> to vector<4x4xf32>
    %6 = vector.extract_strided_slice %1 {offsets = [0, 4], sizes = [4, 20], strides = [1, 1]} : vector<4x24xf32> to vector<4x20xf32>
    %7 = tpu.concatenate %6, %5 in 1 : vector<4x20xf32>, vector<4x4xf32> -> vector<4x24xf32>
    %8 = arith.addf %7, %3 : vector<4x24xf32>
    %c0_10 = arith.constant 0 : index
    %9 = memref.load %arg2[%c0_10] : memref<1xf32, #tpu.memory_space<smem>>
    %cst = arith.constant 0.000000e+00 : f32
    %10 = vector.broadcast %cst : f32 to vector<4x24xf32>
    %11 = arith.cmpf oge, %8, %10 : vector<4x24xf32>
    %12 = vector.broadcast %9 : f32 to vector<4x24xf32>
    %13 = arith.mulf %12, %8 : vector<4x24xf32>
    %14 = arith.select %11, %8, %13 : vector<4x24xi1>, vector<4x24xf32>
    %c0_11 = arith.constant 0 : index
    %c0_12 = arith.constant 0 : index
    %15 = vector.load %arg3[%c0_11, %c0_12] : memref<6x4xf32, #tpu.memory_space<vmem>>, vector<6x4xf32>
    %cst_13 = arith.constant dense<0.000000e+00> : vector<6x24xf32>
    %16 = tpu.matmul %15, %14, %cst_13 {dimension_numbers = #tpu.dot_dimension_numbers<[1], [0], [0], [1], [0, 0, 1, 1], [], []>} : vector<6x4xf32>, vector<4x24xf32>, vector<6x24xf32> -> vector<6x24xf32>
    %cst_14 = arith.constant 0.000000e+00 : f32
    %17 = vector.broadcast %cst_14 : f32 to vector<6x24xf32>
    %18 = arith.maximumf %16, %17 : vector<6x24xf32>
    %c0_15 = arith.constant 0 : index
    %c0_16 = arith.constant 0 : index
    %c0_17 = arith.constant 0 : index
    %19 = vector.load %arg6[%c0_15, %c0_16, %c0_17] : memref<1x6x24xf32, #tpu.memory_space<vmem>>, vector<1x6x24xf32>
    %20 = vector.shape_cast %19 : vector<1x6x24xf32> to vector<6x24xf32>
    %21 = vector.shape_cast %18 : vector<6x24xf32> to vector<1x6x24xf32>
    tpu.vector_store %arg6[%c0_15, %c0_16, %c0_17], %21 {strides = array<i32>} : memref<1x6x24xf32, #tpu.memory_space<vmem>>, vector<1x6x24xf32>,
    return
  }
  func.func @transform_0(%arg0: i32, %arg1: i32) -> i32 {
    %c0_i32 = arith.constant 0 : i32
    %c0_i32_0 = arith.constant 0 : i32
    return %c0_i32 : i32
  }
  func.func @transform_1(%arg0: i32, %arg1: i32) -> (i32, i32) {
    %c0_i32 = arith.constant 0 : i32
    %c0_i32_0 = arith.constant 0 : i32
    %c0_i32_1 = arith.constant 0 : i32
    return %c0_i32, %c0_i32_0 : i32, i32
  }
  func.func @transform_2(%arg0: i32, %arg1: i32) -> (i32, i32, i32, i32) {
    %c0_i32 = arith.constant 0 : i32
    %c0_i32_0 = arith.constant 0 : i32
    %c0_i32_1 = arith.constant 0 : i32
    return %arg0, %c0_i32, %c0_i32_0, %arg1 : i32, i32, i32, i32
  }
  func.func @transform_3(%arg0: i32, %arg1: i32) -> (i32, i32, i32, i32) {
    %c0_i32 = arith.constant 0 : i32
    %c0_i32_0 = arith.constant 0 : i32
    %c0_i32_1 = arith.constant 0 : i32
    return %arg0, %arg1, %c0_i32, %c0_i32_0 : i32, i32, i32, i32
  }
  func.func @transform_4(%arg0: i32, %arg1: i32) -> (i32, i32, i32) {
    %c0_i32 = arith.constant 0 : i32
    %c0_i32_0 = arith.constant 0 : i32
    return %arg0, %c0_i32, %arg1 : i32, i32, i32
  }
}

</mosaic_0001>

<llo_original>
// kernel: tpu_custom_call.1
$region0: #{tpu_custom_call.1}
  #allocation0 [shape = 'u32[]', space=smem, size = 0x4, offset = 0x4, fixed_abs, tag = 'smem constant byte address 0x4 - core index']
  #allocation1 [shape = 'u32[144,128]{1,0:T(1,128)}', space=vmem, size = 0x12000, scoped, tag = 'internal scratch']
  #allocation2 [shape = 'f32[1]{0:T(128)S(6)}', space=smem, size = 0x200, scoped, tag = 'scoped memory for tpu_custom_call.1']
  %s0 = inlined_call_operand.<no memory space> [shape: f32[1], index: 0, kind: input, shape index: {}]
  %s1 = inlined_call_operand.vmem [shape: f32[6,4], index: 1, kind: input, shape index: {}]
  %s2 = inlined_call_operand.vmem [shape: f32[2,2,4,24], index: 2, kind: input, shape index: {}]
  %s3 = inlined_call_operand.hbm [shape: f32[2,1,4,4], index: 3, kind: input, shape index: {}]
  %s4 = inlined_call_operand.vmem [shape: f32[2,6,24], index: 4, kind: output, shape index: {}]
  %s5 = sld [smem:[#allocation0]]
  $region53: #{tpu_custom_call.1} parent=0
    _
  %s7 = ssub.s32 1, %s5
  %s8 = scalar_select 0, %s7, %s5
  %9 = sst [smem:[#allocation2]] %s0
  $region1: #{tpu_custom_call.1} parent=0
    #allocation3 [shape = 'u8[4096]{0}', space=vmem, size = 0x1000, scoped, tag = 'input window, operand 3']
    #allocation4 [shape = 's32[2]{0}', space=sflag, size = 0x8, scoped, tag = 'scoped memory for tpu_custom_call.1']
    %10 = vsyncpa [#allocation4], 0
    %s11 = scalar_lea.sflag [#allocation4], 1
    %12 = vsyncpa %s11, 0
    loop: start=0, step=1, limit=4
    $region2: #{tpu_custom_call.1} parent=1 // loop_pre_header
      _
    $region3: #{tpu_custom_call.1} parent=1 // loop_header
      %s14 = sphi 0, %s18
      %p15 = scmp.ge.s32.totalorder %s14, 4
      %s21 = sphi 0, %s33
      %s22 = sphi 0, %s29
      %s23 = sphi 0, %s21
      %s24 = sphi 0, %s22
      %s25 = sphi 0, %s23
      %s26 = sphi 0, %s24
      %s34 = sphi 0, %s34
      %s36 = sphi 0, %s34
      %s37 = sphi 0, %s36
      %s51 = sphi 0, %s37
      %s55 = sphi 0, %s55
      %s57 = sphi 0, %s55
      %s58 = sphi 0, %s57
      %s72 = sphi 0, %s58
      %s80 = sphi 0, %s82
      %s83 = sphi 0, %s80
      %s84 = sphi 0, %s83
      %s100 = sphi 0, %s84
      %s108 = sphi 0, %s110
      %s111 = sphi 0, %s108
      %s112 = sphi 0, %s111
      %s128 = sphi 0, %s112
      %s136 = sphi 0, %s138
      %s139 = sphi 0, %s136
      %s140 = sphi 0, %s139
      %s156 = sphi 0, %s140
    $region4: #{tpu_custom_call.1} parent=1 // loop_header_branch
      %17 = sbr.rel (%p15) target = $region8
    $region5: #{tpu_custom_call.1} parent=1 // loop_body
      %s19 = ssub.s32 %s14, 1
      %s20 = ssub.s32 %s14, 2
      %s27 = sadd.s32 1, %s22
      %p28 = scmp.ge.s32.totalorder %s27, 1
      %s29 = scalar_select %p28, 0, %s27
      %s30 = sadd.s32 1, %s21
      %s31 = scalar_select %p28, %s30, %s21
      %p32 = scmp.ge.s32.totalorder %s31, 2
      %s33 = scalar_select %p32, 0, %s31
      %s35 = sadd.s32 %s34, 1
      %p38 = scmp.eq.s32.totalorder %s14, 1
      %p39 = scmp.ne.s32.totalorder %s34, %s36
      %p40 = scmp.eq.s32.totalorder %s14, 0
      %p41 = por %p39, %p40
      %p42 = scmp.ne.s32.totalorder %s34, %s36
      %p43 = scmp.eq.s32.totalorder %s19, 1
      %p44 = por %p42, %p43
      %p45 = scmp.ne.s32.totalorder %s36, %s37
      %p46 = scmp.eq.s32.totalorder %s19, 0
      %p47 = por %p45, %p46
      %p48 = scmp.ne.s32.totalorder %s36, %s37
      %p49 = scmp.eq.s32.totalorder %s20, 1
      %p50 = por %p48, %p49
      %p52 = scmp.ne.s32.totalorder %s37, %s51
      %p53 = scmp.eq.s32.totalorder %s20, 0
      %p54 = por %p52, %p53
      %s56 = sadd.s32 %s55, 1
      %p59 = scmp.eq.s32.totalorder %s14, 1
      %p60 = scmp.ne.s32.totalorder %s55, %s57
      %p61 = scmp.eq.s32.totalorder %s14, 0
      %p62 = por %p60, %p61
      %p63 = scmp.ne.s32.totalorder %s55, %s57
      %p64 = scmp.eq.s32.totalorder %s19, 1
      %p65 = por %p63, %p64
      %p66 = scmp.ne.s32.totalorder %s57, %s58
      %p67 = scmp.eq.s32.totalorder %s19, 0
      %p68 = por %p66, %p67
      %p69 = scmp.ne.s32.totalorder %s57, %s58
      %p70 = scmp.eq.s32.totalorder %s20, 1
      %p71 = por %p69, %p70
      %p73 = scmp.ne.s32.totalorder %s58, %s72
      %p74 = scmp.eq.s32.totalorder %s20, 0
      %p75 = por %p73, %p74
      %s76 = ssub.s32 %s21, %s33
      %s77 = ssub.s32 %s22, %s29
      %s78 = sor.u32 %s76, %s77
      %p79 = scmp.eq.s32.totalorder %s78, 0
      %s81 = sadd.s32 %s80, 1
      %s82 = scalar_select %p79, %s80, %s81
      %p85 = pneg %p79
      %p86 = scmp.eq.s32.totalorder %s14, 1
      %p87 = por %p85, %p86
      %p88 = scmp.ne.s32.totalorder %s80, %s83
      %p89 = scmp.eq.s32.totalorder %s14, 0
      %p90 = por %p88, %p89
      %p91 = scmp.ne.s32.totalorder %s80, %s83
      %p92 = scmp.eq.s32.totalorder %s19, 1
      %p93 = por %p91, %p92
      %p94 = scmp.ne.s32.totalorder %s83, %s84
      %p95 = scmp.eq.s32.totalorder %s19, 0
      %p96 = por %p94, %p95
      %p97 = scmp.ne.s32.totalorder %s83, %s84
      %p98 = scmp.eq.s32.totalorder %s20, 1
      %p99 = por %p97, %p98
      %p101 = scmp.ne.s32.totalorder %s84, %s100
      %p102 = scmp.eq.s32.totalorder %s20, 0
      %p103 = por %p101, %p102
      %s104 = ssub.s32 %s21, %s33
      %s105 = ssub.s32 %s22, %s29
      %s106 = sor.u32 %s104, %s105
      %p107 = scmp.eq.s32.totalorder %s106, 0
      %s109 = sadd.s32 %s108, 1
      %s110 = scalar_select %p107, %s108, %s109
      %p113 = pneg %p107
      %p114 = scmp.eq.s32.totalorder %s14, 1
      %p115 = por %p113, %p114
      %p116 = scmp.ne.s32.totalorder %s108, %s111
      %p117 = scmp.eq.s32.totalorder %s14, 0
      %p118 = por %p116, %p117
      %p119 = scmp.ne.s32.totalorder %s108, %s111
      %p120 = scmp.eq.s32.totalorder %s19, 1
      %p121 = por %p119, %p120
      %p122 = scmp.ne.s32.totalorder %s111, %s112
      %p123 = scmp.eq.s32.totalorder %s19, 0
      %p124 = por %p122, %p123
      %p125 = scmp.ne.s32.totalorder %s111, %s112
      %p126 = scmp.eq.s32.totalorder %s20, 1
      %p127 = por %p125, %p126
      %p129 = scmp.ne.s32.totalorder %s112, %s128
      %p130 = scmp.eq.s32.totalorder %s20, 0
      %p131 = por %p129, %p130
      %s132 = ssub.s32 %s21, %s33
      %s133 = ssub.s32 %s22, %s29
      %s134 = sor.u32 %s132, %s133
      %p135 = scmp.eq.s32.totalorder %s134, 0
      %s137 = sadd.s32 %s136, 1
      %s138 = scalar_select %p135, %s136, %s137
      %p141 = pneg %p135
      %p142 = scmp.eq.s32.totalorder %s14, 1
      %p143 = por %p141, %p142
      %p144 = scmp.ne.s32.totalorder %s136, %s139
      %p145 = scmp.eq.s32.totalorder %s14, 0
      %p146 = por %p144, %p145
      %p147 = scmp.ne.s32.totalorder %s136, %s139
      %p148 = scmp.eq.s32.totalorder %s19, 1
      %p149 = por %p147, %p148
      %p150 = scmp.ne.s32.totalorder %s139, %s140
      %p151 = scmp.eq.s32.totalorder %s19, 0
      %p152 = por %p150, %p151
      %p153 = scmp.ne.s32.totalorder %s139, %s140
      %p154 = scmp.eq.s32.totalorder %s20, 1
      %p155 = por %p153, %p154
      %p157 = scmp.ne.s32.totalorder %s140, %s156
      %p158 = scmp.eq.s32.totalorder %s20, 0
      %p159 = por %p157, %p158
      %p160 = scmp.le.s32.totalorder 1, %s14
      %p161 = scmp.lt.s32.totalorder %s14, 3
      %p162 = pnand %p160, %p161
      %p163 = pneg %p162
      // Predicated region
      $region9: #{tpu_custom_call.1} parent=5 // pred_check
        _
      $region10: #{tpu_custom_call.1} parent=5 // pred_check_branch
        %165 = sbr.rel (%p162) target = $region12
      $region11: #{tpu_custom_call.1} parent=5 // pred_region
        %s166 = ssub.s32 %s14, 1
        // Predicated region
        $region13: #{tpu_custom_call.1} parent=11 // pred_check
          %p167 = pneg %p47
        $region14: #{tpu_custom_call.1} parent=11 // pred_check_branch
          %169 = sbr.rel (%p167) target = $region16
        $region15: #{tpu_custom_call.1} parent=11 // pred_region
          _
        $region16: #{tpu_custom_call.1} parent=11 // pred_fallthru
          _
        // Predicated region
        $region17: #{tpu_custom_call.1} parent=11 // pred_check
          %p170 = pneg %p68
        $region18: #{tpu_custom_call.1} parent=11 // pred_check_branch
          %172 = sbr.rel (%p170) target = $region20
        $region19: #{tpu_custom_call.1} parent=11 // pred_region
          _
        $region20: #{tpu_custom_call.1} parent=11 // pred_fallthru
          _
      $region12: #{tpu_custom_call.1} parent=5 // pred_fallthru
        _
      %p173 = scmp.lt.s32.totalorder %s14, 2
      // Predicated region
      $region21: #{tpu_custom_call.1} parent=5 // pred_check
        %p174 = pneg %p173
      $region22: #{tpu_custom_call.1} parent=5 // pred_check_branch
        %176 = sbr.rel (%p174) target = $region24
      $region23: #{tpu_custom_call.1} parent=5 // pred_region
        // Predicated region
        $region25: #{tpu_custom_call.1} parent=23 // pred_check
          %p177 = pneg %p90
        $region26: #{tpu_custom_call.1} parent=23 // pred_check_branch
          %179 = sbr.rel (%p177) target = $region28
        $region27: #{tpu_custom_call.1} parent=23 // pred_region
          %p180 = scmp.lt.s32.totalorder %s21, 1
          %s181 = scalar_select %p180, %s21, 1
          %p182 = scmp.lt.s32.totalorder %s22, 0
          %s183 = scalar_select %p182, %s22, 0
          %s184 = smul.addr %s181, 2
          %s185 = sadd.s32 %s183, %s184
          %s186 = smul.addr %s185, 4
          %s187 = scalar_lea.vmem %s2, %s186
        $region28: #{tpu_custom_call.1} parent=23 // pred_fallthru
          _
        // Predicated region
        $region29: #{tpu_custom_call.1} parent=23 // pred_check
          %p188 = pneg %p118
        $region30: #{tpu_custom_call.1} parent=23 // pred_check_branch
          %190 = sbr.rel (%p188) target = $region32
        $region31: #{tpu_custom_call.1} parent=23 // pred_region
          %s191 = sand.u32 %s108, 1
          %s192 = scalar_lea.sflag [#allocation4], %s191
          %s193 = sand.u32 %s108, 1
          %s194 = smul.addr %s193, 4
          %s195 = scalar_lea.vmem [#allocation3], %s194
          %s197 = ssub.s32 64, 64
          %198 = vsyncadd %s192, %s197
          %s199 = sadd.s32 %s22, %s21
          %s200 = smul.addr %s199, 64
          %s201 = scalar_lea.hbm %s3, %s200
          %s203 = sshll.u32 %s195, 4
          %s204 = int_to_ptr.vmem [resolvable:$true] %s203
          %206 = dma.hbm_to_vmem [thread:$0]  %s201, 64, %s204, %s192
        $region32: #{tpu_custom_call.1} parent=23 // pred_fallthru
          _
      $region24: #{tpu_custom_call.1} parent=5 // pred_fallthru
        _
      %p207 = scmp.le.s32.totalorder 1, %s14
      %p208 = scmp.lt.s32.totalorder %s14, 3
      %p209 = pnand %p207, %p208
      %p210 = pneg %p209
      // Predicated region
      $region33: #{tpu_custom_call.1} parent=5 // pred_check
        _
      $region34: #{tpu_custom_call.1} parent=5 // pred_check_branch
        %212 = sbr.rel (%p209) target = $region36
      $region35: #{tpu_custom_call.1} parent=5 // pred_region
        %s213 = ssub.s32 %s14, 1
        %s214 = sand.u32 %s111, 1
        %s215 = scalar_lea.sflag [#allocation4], %s214
        %s216 = sand.u32 %s111, 1
        %s217 = smul.addr %s216, 4
        %s218 = scalar_lea.vmem [#allocation3], %s217
        // Predicated region
        $region37: #{tpu_custom_call.1} parent=35 // pred_check
          %p219 = pneg %p124
        $region38: #{tpu_custom_call.1} parent=35 // pred_check_branch
          %221 = sbr.rel (%p219) target = $region40
        $region39: #{tpu_custom_call.1} parent=35 // pred_region
          %222 = dma.done %s215, 64
        $region40: #{tpu_custom_call.1} parent=35 // pred_fallthru
          _
        %p223 = pneg %p47
        %p224 = pneg %p44
        %p225 = pneg %p68
        %p226 = pneg %p65
        %p227 = scmp.lt.s32.totalorder %s23, 1
        %s228 = scalar_select %p227, %s23, 1
        %p229 = scmp.lt.s32.totalorder %s24, 0
        %s230 = scalar_select %p229, %s24, 0
        %s231 = smul.addr %s228, 2
        %s232 = sadd.s32 %s230, %s231
        %s233 = smul.addr %s232, 4
        %s234 = scalar_lea.vmem %s2, %s233
        %p235 = pneg %p96
        %p236 = pneg %p93
        %s237 = sand.u32 %s111, 1
        %s238 = scalar_lea.sflag [#allocation4], %s237
        %s239 = sand.u32 %s111, 1
        %s240 = smul.addr %s239, 4
        %s241 = scalar_lea.vmem [#allocation3], %s240
        %p242 = pneg %p124
        %p243 = pneg %p121
        %p244 = pneg %p152
        %p245 = pneg %p149
        %p246 = scmp.lt.s32.totalorder %s23, 1
        %s247 = scalar_select %p246, %s23, 1
        %p248 = scmp.lt.s32.totalorder %s24, 0
        %s249 = scalar_select %p248, %s24, 0
        %s250 = sadd.s32 %s249, %s247
        %s251 = smul.addr %s250, 8
        %s252 = scalar_lea.vmem %s4, %s251
        %p253 = scmp.lt.s32.totalorder %s23, 1
        %s254 = scalar_select %p253, %s23, 1
        %p255 = scmp.lt.s32.totalorder %s24, 0
        %s256 = scalar_select %p255, %s24, 0
        %s257 = smul.addr %s254, 2
        %s258 = sadd.s32 %s256, %s257
        %s259 = smul.addr %s258, 4
        %s260 = scalar_lea.vmem %s2, %s259
        %p261 = scmp.lt.s32.totalorder %s23, 1
        %s262 = scalar_select %p261, %s23, 1
        %p263 = scmp.lt.s32.totalorder %s24, 0
        %s264 = scalar_select %p263, %s24, 0
        %s265 = sadd.s32 %s264, %s262
        %s266 = smul.addr %s265, 8
        %s267 = scalar_lea.vmem %s4, %s266
        %v268 = vld [vmem:[%s260] sm:$0xf]
        %s269 = scalar_lea.vmem %s260, 4
        %v270 = vld [vmem:[%s269] sm:$0xf]
        %v271 = vld [vmem:[%s218] sm:$0xf]
        %273 = vrot.lane.b32.xlu0 %v268, 124
        %v274 = vpop.permute.xlu0 %273
        %277 = vrot.lane.b32.xlu0 %v271, 20
        %v278 = vpop.permute.xlu0 %277
        %vm280 = vcmask 162816
        %v281 = vsel %vm280, %v274, %v278
        %v282 = vadd.f32 %v281, %v270
        %s283 = sld [smem:[#allocation2]]
        %vm284 = vcmp.ge.f32.partialorder %v282, 0.0
        %v285 = vstv %s283
        %v286 = vmul.f32 %v285, %v282
        %v287 = vsel %vm284, %v282, %v286
        %v288 = vld [vmem:[%s1] sm:$0x3f]
        %vm289 = vcmask 31744
        %v291 = vsel %vm289, %v288, 0
        %vm293 = vcmask 1043456
        %v295 = vsel %vm293, %v287, 0
        %297 = vmatprep.subr.mxu0 0.0
        %298 = vmatpush1.msra.mxu0 %v295
        %299 = vmatprep.subr.mxu0 0.0
        %300 = vmatpush1.msra.mxu0 0.0
        %301 = vmatprep.subr.mxu0 0.0
        %302 = vmatpush1.msra.mxu0 0.0
        %303 = vmatprep.subr.mxu0 0.0
        %304 = vmatpush1.msra.mxu0 0.0
        %305 = vmatprep.subr.mxu0 0.0
        %306 = vmatpush1.msra.mxu0 0.0
        %307 = vmatprep.subr.mxu0 0.0
        %308 = vmatpush1.msra.mxu0 0.0
        %309 = vmatprep.subr.mxu0 0.0
        %310 = vmatpush1.msra.mxu0 0.0
        %311 = vmatprep.subr.mxu0 0.0
        %312 = vmatpush1.msra.mxu0 0.0
        %313 = vmatprep.subr.mxu0 0.0
        %314 = vmatpush1.msra.mxu0 0.0
        %315 = vmatprep.subr.mxu0 0.0
        %316 = vmatpush1.msra.mxu0 0.0
        %317 = vmatprep.subr.mxu0 0.0
        %318 = vmatpush1.msra.mxu0 0.0
        %319 = vmatprep.subr.mxu0 0.0
        %320 = vmatpush1.msra.mxu0 0.0
        %321 = vmatprep.subr.mxu0 0.0
        %322 = vmatpush1.msra.mxu0 0.0
        %323 = vmatprep.subr.mxu0 0.0
        %324 = vmatpush1.msra.mxu0 0.0
        %325 = vmatprep.subr.mxu0 0.0
        %326 = vmatpush1.msra.mxu0 0.0
        %327 = vmatprep.subr.mxu0 0.0
        %328 = vmatpush1.msra.mxu0 0.0
        %329 = vmatprep.subr.mxu0 0.0
        %330 = vmatpush1.msra.mxu0 0.0
        %331 = vmatprep.subr.mxu0 0.0
        %332 = vmatpush1.msra.mxu0 0.0
        %333 = vmatprep.subr.mxu0 0.0
        %334 = vmatpush1.msra.mxu0 0.0
        %335 = vmatprep.subr.mxu0 0.0
        %336 = vmatpush1.msra.mxu0 0.0
        %337 = vmatprep.subr.mxu0 0.0
        %338 = vmatpush1.msra.mxu0 0.0
        %339 = vmatprep.subr.mxu0 0.0
        %340 = vmatpush1.msra.mxu0 0.0
        %341 = vmatprep.subr.mxu0 0.0
        %342 = vmatpush1.msra.mxu0 0.0
        %343 = vmatprep.subr.mxu0 0.0
        %344 = vmatpush1.msra.mxu0 0.0
        %345 = vmatprep.subr.mxu0 0.0
        %346 = vmatpush1.msra.mxu0 0.0
        %347 = vmatprep.subr.mxu0 0.0
        %348 = vmatpush1.msra.mxu0 0.0
        %349 = vmatprep.subr.mxu0 0.0
        %350 = vmatpush1.msra.mxu0 0.0
        %351 = vmatprep.subr.mxu0 0.0
        %352 = vmatpush1.msra.mxu0 0.0
        %353 = vmatprep.subr.mxu0 0.0
        %354 = vmatpush1.msra.mxu0 0.0
        %355 = vmatprep.subr.mxu0 0.0
        %356 = vmatpush1.msra.mxu0 0.0
        %357 = vmatprep.subr.mxu0 0.0
        %358 = vmatpush1.msra.mxu0 0.0
        %359 = vmatprep.subr.mxu0 0.0
        %360 = vmatpush1.msra.mxu0 0.0
        %361 = vmatprep.mubr.f32.mxu0 0.0
        %362 = vmatmul.mubr.f32.gmra.mrb[0].mxu0 %v291
        %v363 = vpop.f32.mrb[0].mxu0
        %v364 = vadd.f32 0.0, %v363
        %v365 = vpop.f32.mrb[0].mxu0
        %366 = vdwg.mxu0
        %v367 = vmax.f32 %v364, 0.0
        %vm368 = vcmask 193536
        %369 = vst.msk [vmem:[%s267] sm:$0x3f] %vm368, %v367
        %p370 = scmp.lt.s32.totalorder %s23, 1
        %s371 = scalar_select %p370, %s23, 1
        %p372 = scmp.lt.s32.totalorder %s24, 0
        %s373 = scalar_select %p372, %s24, 0
        %s374 = sadd.s32 %s373, %s371
        %s375 = smul.addr %s374, 8
        %s376 = scalar_lea.vmem %s4, %s375
        // Predicated region
        $region41: #{tpu_custom_call.1} parent=35 // pred_check
          %p377 = pneg %p149
        $region42: #{tpu_custom_call.1} parent=35 // pred_check_branch
          %379 = sbr.rel (%p377) target = $region44
        $region43: #{tpu_custom_call.1} parent=35 // pred_region
          _
        $region44: #{tpu_custom_call.1} parent=35 // pred_fallthru
          _
      $region36: #{tpu_custom_call.1} parent=5 // pred_fallthru
        _
      %p380 = scmp.le.s32.totalorder 2, %s14
      // Predicated region
      $region45: #{tpu_custom_call.1} parent=5 // pred_check
        %p381 = pneg %p380
      $region46: #{tpu_custom_call.1} parent=5 // pred_check_branch
        %383 = sbr.rel (%p381) target = $region48
      $region47: #{tpu_custom_call.1} parent=5 // pred_region
        %s384 = ssub.s32 %s14, 2
        // Predicated region
        $region49: #{tpu_custom_call.1} parent=47 // pred_check
          %p385 = pneg %p155
        $region50: #{tpu_custom_call.1} parent=47 // pred_check_branch
          %387 = sbr.rel (%p385) target = $region52
        $region51: #{tpu_custom_call.1} parent=47 // pred_region
          %p388 = scmp.lt.s32.totalorder %s25, 1
          %s389 = scalar_select %p388, %s25, 1
          %p390 = scmp.lt.s32.totalorder %s26, 0
          %s391 = scalar_select %p390, %s26, 0
          %s392 = sadd.s32 %s391, %s389
          %s393 = smul.addr %s392, 8
          %s394 = scalar_lea.vmem %s4, %s393
        $region52: #{tpu_custom_call.1} parent=47 // pred_fallthru
          _
      $region48: #{tpu_custom_call.1} parent=5 // pred_fallthru
        _
    $region6: #{tpu_custom_call.1} parent=1 // loop_footer
      %s18 = sadd.s32 1, %s14
    $region7: #{tpu_custom_call.1} parent=1 // loop_footer_branch
      %13 = sbr.rel target = $region3
    $region8: #{tpu_custom_call.1} parent=1 // loop_exit
      _
    %395 = vsyncpa [#allocation4], 1
    %s396 = scalar_lea.sflag [#allocation4], 1
    %397 = vsyncpa %s396, 1

</llo_original>
